<compile_context>
chip_gen: v7x
topology: tpu7x:2x2x1
jax: 0.10.0
libtpu: 0.0.40
codegen_flags: <defaults>
</compile_context>

<pallas_src>
import math

import jax
import jax.numpy as jnp
from jax.experimental import pallas as pl
from jax.experimental.pallas import tpu as pltpu

_LANES = 128
_SUBLANES = 8


def _round_up(v: int, m: int) -> int:
    return -(-v // m) * m


def _make_saturation_kernel(c: int, rows_total: int, rows_per_tile: int,
                            needs_row_mask: bool):
    """Kernel factory; all shape parameters are trace-time constants."""
    inv_c = 1.0 / c
    inv_cm1 = (1.0 / (c - 1)) if c > 1 else float("nan")  # ddof=1, torch-compatible

    def kernel(x_ref, o_ref):
        # x_ref: (C, R, 128) tile in VMEM.  o_ref: (8, 128) f32 partial sums.
        #
        # Shifted single pass over channels: with d_c = x_c - x_0 the per-pixel
        # unbiased variance is (sum d_c^2 - (sum d_c)^2 / C) / (C - 1).
        # Reductions are over the leading (major) axis -> pure VPU vreg adds,
        # each channel slab is loaded exactly once, and the shift keeps the
        # one-pass formula well conditioned for large DC offsets.
        x0 = x_ref[0].astype(jnp.float32)            # (R, 128)
        s = jnp.zeros_like(x0)
        q = jnp.zeros_like(x0)
        for ch in range(1, c):
            d = x_ref[ch].astype(jnp.float32) - x0
            s = s + d
            q = q + d * d
        var = (q - s * s * inv_c) * inv_cm1          # (R, 128) per-pixel variance

        if needs_row_mask:
            # The last grid block overruns the row extent of the array; rows
            # beyond rows_total contain unspecified data (partial-block OOB
            # read).  Zero their contribution.  Cheap VPU compare+select.
            row = jax.lax.broadcasted_iota(jnp.int32, var.shape, 0)
            row = row + pl.program_id(0) * rows_per_tile
            var = jnp.where(row < rows_total, var, 0.0)

        # Sublane-blocked partial reduce: grouping rows by 8 matches the (8,128)
        # vreg tiling, so this is vreg-wise VPU adds only.  The single
        # cross-lane reduce-to-scalar happens once in the tiny wrapper epilogue.
        o_ref[...] = jnp.sum(
            var.reshape(rows_per_tile // _SUBLANES, _SUBLANES, _LANES), axis=0)

    return kernel


def saturation(adv_patch: jax.Array, *,
               max_rows_per_tile: int | None = None,
               vmem_budget_bytes: int = 12 * 1024 * 1024,
               allow_xla_fast_path: bool = True,
               small_input_bytes: int = 256 * 1024) -> jax.Array:
    """Pallas equivalent of SaturationCalculator.forward. Input: (C, H, W) (or (C, ...))."""
    c = adv_patch.shape[0]
    n = math.prod(adv_patch.shape[1:])               # true number of pixels
    itemsize = jnp.dtype(adv_patch.dtype).itemsize

    # Fast path: for tiny patches (e.g. a (3,16,16) adversarial patch = 3 KB)
    # the pallas_call fixed cost dominates by orders of magnitude; a fused XLA
    # reduction is strictly faster.  Disable with allow_xla_fast_path=False.
    if allow_xla_fast_path and c * n * itemsize <= small_input_bytes:
        x32 = adv_patch.reshape(c, n).astype(jnp.float32)
        return jnp.mean(jnp.var(x32, axis=0, ddof=1))

    # Lane-dense layout: flatten spatial dims (free reshape) and view as
    # (C, rows, 128).  No full-array pad: the row axis is left un-padded and
    # the last grid block may be partial (masked in-kernel).  Only a ragged
    # column tail (H*W % 128 != 0) requires a pad; padded pixels are all-zero
    # across channels -> var 0 -> contribute nothing, and we normalize by the
    # TRUE pixel count n.
    x = adv_patch.reshape(c, n)
    n_cols = _round_up(n, _LANES)
    if n_cols != n:
        x = jnp.pad(x, ((0, 0), (0, n_cols - n)))
    rows = n_cols // _LANES
    x = x.reshape(c, rows, _LANES)

    # rows_per_tile: multiple of the sublane packing for the dtype, sized from
    # a VMEM budget assuming 3-deep input buffering (so large C / wide dtypes
    # stay under the scoped-VMEM defaults on v5e/v6e/v7x), and capped so big
    # inputs produce >= ~8 grid steps — the "parallel" axis can then shard
    # across v7x's two TensorCores instead of pinning the stream to one TC.
    sub = max(_SUBLANES, 32 // itemsize)             # 8 f32, 16 bf16, 32 int8/fp8
    bytes_per_row = c * _LANES * itemsize
    vmem_rows = max(sub, (vmem_budget_bytes // (3 * bytes_per_row)) // sub * sub)
    want = min(max(_round_up(pl.cdiv(rows, 8), sub), 256), 2048)
    rpt = min(vmem_rows, want, _round_up(rows, sub))
    if max_rows_per_tile is not None:
        rpt = min(rpt, max(sub, _round_up(max_rows_per_tile, sub)))
    rpt = max(sub, rpt // sub * sub)

    num_tiles = pl.cdiv(rows, rpt)
    needs_row_mask = num_tiles * rpt != rows

    # Input spec; use a 3-deep pipeline when there are enough tiles to benefit
    # (hides DMA gaps at tile boundaries on fast-HBM parts like v7x).
    in_spec = pl.BlockSpec((c, rpt, _LANES), lambda i: (0, i, 0))
    if num_tiles >= 3:
        try:
            in_spec = pl.BlockSpec((c, rpt, _LANES), lambda i: (0, i, 0),
                                   pipeline_mode=pl.Buffered(3))
        except Exception:
            pass  # older jax without pipeline_mode: default double-buffering

    partials = pl.pallas_call(
        _make_saturation_kernel(c, rows, rpt, needs_row_mask),
        out_shape=jax.ShapeDtypeStruct((num_tiles, _SUBLANES, _LANES), jnp.float32),
        grid=(num_tiles,),
        in_specs=[in_spec],
        out_specs=pl.BlockSpec((None, _SUBLANES, _LANES), lambda i: (i, 0, 0)),
        compiler_params=pltpu.CompilerParams(dimension_semantics=("parallel",)),
    )(x)

    # Tiny epilogue: one cross-lane reduction + normalization by the true count.
    return jnp.sum(partials) / jnp.float32(n)


if __name__ == "__main__":
    key = jax.random.PRNGKey(0)
    k1, k2, k3 = jax.random.split(key, 3)

    # The module's actual use case: a small RGB adversarial patch in [0, 1].
    patch = jax.random.uniform(k1, (3, 16, 16), dtype=jnp.float32)
    ref = jnp.mean(jnp.var(patch, axis=0, ddof=1))

    # 1) Force the Pallas path even for the tiny patch (single tile, row mask).
    out = jax.block_until_ready(saturation(patch, allow_xla_fast_path=False))
    assert jnp.allclose(out, ref, rtol=1e-5, atol=1e-5), (out, ref)

    # 2) Default path for tiny inputs = fused XLA reduction (launch-cost fast path).
    out_fast = jax.block_until_ready(saturation(patch))
    assert jnp.allclose(out_fast, ref, rtol=1e-5, atol=1e-5), (out_fast, ref)

    # 3) Ragged spatial size (H*W % 128 != 0) + multi-tile grid + partial last
    #    block (in-kernel row mask), with a small forced tile.
    patch2 = jax.random.uniform(k2, (3, 40, 40), dtype=jnp.float32)
    ref2 = jnp.mean(jnp.var(patch2, axis=0, ddof=1))
    out2 = jax.block_until_ready(
        saturation(patch2, allow_xla_fast_path=False, max_rows_per_tile=8))
    assert jnp.allclose(out2, ref2, rtol=1e-5, atol=1e-5), (out2, ref2)

    # 4) 4-tile grid exercising the 3-deep pipelined (pl.Buffered) input path.
    patch3 = jax.random.uniform(k3, (3, 80, 80), dtype=jnp.float32)
    ref3 = jnp.mean(jnp.var(patch3, axis=0, ddof=1))
    out3 = jax.block_until_ready(
        saturation(patch3, allow_xla_fast_path=False, max_rows_per_tile=16))
    assert jnp.allclose(out3, ref3, rtol=1e-5, atol=1e-5), (out3, ref3)

    print("KERNEL_OK")
</pallas_src>

<mosaic_0001>
module attributes {stable_mosaic.version = 11 : i64} {
  func.func @kernel(%arg0: i32, %arg1: memref<3x8x128xf32, #tpu.memory_space<vmem>>, %arg2: memref<1x8x128xf32, #tpu.memory_space<vmem>>) attributes {dimension_semantics = [#tpu.dimension_semantics<parallel>], iteration_bounds = array<i64: 1>, scalar_prefetch = 0 : i64, scratch_operands = 0 : i64, tpu.core_type = #tpu.core_type<tc>, window_params = [{transform_indices = @transform_0, window_bounds = array<i64: 3, 8, 128>}, {transform_indices = @transform_1, window_bounds = array<i64: 1, 8, 128>}]} {
    %c0 = arith.constant 0 : index
    %c0_0 = arith.constant 0 : index
    %c0_1 = arith.constant 0 : index
    %0 = vector.load %arg1[%c0, %c0_0, %c0_1] : memref<3x8x128xf32, #tpu.memory_space<vmem>>, vector<1x8x128xf32>
    %1 = vector.shape_cast %0 : vector<1x8x128xf32> to vector<8x128xf32>
    %cst = arith.constant 0.000000e+00 : f32
    %2 = vector.broadcast %cst : f32 to vector<8x128xf32>
    %cst_2 = arith.constant 0.000000e+00 : f32
    %3 = vector.broadcast %cst_2 : f32 to vector<8x128xf32>
    %c1 = arith.constant 1 : index
    %c0_3 = arith.constant 0 : index
    %c0_4 = arith.constant 0 : index
    %4 = vector.load %arg1[%c1, %c0_3, %c0_4] : memref<3x8x128xf32, #tpu.memory_space<vmem>>, vector<1x8x128xf32>
    %5 = vector.shape_cast %4 : vector<1x8x128xf32> to vector<8x128xf32>
    %6 = arith.subf %5, %1 : vector<8x128xf32>
    %7 = arith.addf %2, %6 : vector<8x128xf32>
    %8 = arith.mulf %6, %6 : vector<8x128xf32>
    %9 = arith.addf %3, %8 : vector<8x128xf32>
    %c2 = arith.constant 2 : index
    %c0_5 = arith.constant 0 : index
    %c0_6 = arith.constant 0 : index
    %10 = vector.load %arg1[%c2, %c0_5, %c0_6] : memref<3x8x128xf32, #tpu.memory_space<vmem>>, vector<1x8x128xf32>
    %11 = vector.shape_cast %10 : vector<1x8x128xf32> to vector<8x128xf32>
    %12 = arith.subf %11, %1 : vector<8x128xf32>
    %13 = arith.addf %7, %12 : vector<8x128xf32>
    %14 = arith.mulf %12, %12 : vector<8x128xf32>
    %15 = arith.addf %9, %14 : vector<8x128xf32>
    %16 = arith.mulf %13, %13 : vector<8x128xf32>
    %cst_7 = arith.constant 0.333333343 : f32
    %17 = vector.broadcast %cst_7 : f32 to vector<8x128xf32>
    %18 = arith.mulf %16, %17 : vector<8x128xf32>
    %19 = arith.subf %15, %18 : vector<8x128xf32>
    %cst_8 = arith.constant 5.000000e-01 : f32
    %20 = vector.broadcast %cst_8 : f32 to vector<8x128xf32>
    %21 = arith.mulf %19, %20 : vector<8x128xf32>
    %22 = tpu.iota {dimensions = array<i32: 0>} : vector<8x128xi32>
    %c8_i32 = arith.constant 8 : i32
    %23 = arith.muli %arg0, %c8_i32 : i32
    %24 = vector.broadcast %23 : i32 to vector<8x128xi32>
    %25 = arith.addi %22, %24 : vector<8x128xi32>
    %c2_i32 = arith.constant 2 : i32
    %26 = vector.broadcast %c2_i32 : i32 to vector<8x128xi32>
    %27 = arith.cmpi slt, %25, %26 : vector<8x128xi32>
    %cst_9 = arith.constant 0.000000e+00 : f32
    %28 = vector.broadcast %cst_9 : f32 to vector<8x128xf32>
    %29 = arith.select %27, %21, %28 : vector<8x128xi1>, vector<8x128xf32>
    %30 = vector.shape_cast %29 : vector<8x128xf32> to vector<1x8x128xf32>
    %cst_10 = arith.constant dense<0.000000e+00> : vector<8x128xf32>
    %31 = vector.multi_reduction <add>, %30, %cst_10 [0] : vector<1x8x128xf32> to vector<8x128xf32>
    %c0_11 = arith.constant 0 : index
    %c0_12 = arith.constant 0 : index
    %c0_13 = arith.constant 0 : index
    %32 = vector.load %arg2[%c0_11, %c0_12, %c0_13] : memref<1x8x128xf32, #tpu.memory_space<vmem>>, vector<1x8x128xf32>
    %33 = vector.shape_cast %32 : vector<1x8x128xf32> to vector<8x128xf32>
    %34 = vector.shape_cast %31 : vector<8x128xf32> to vector<1x8x128xf32>
    tpu.vector_store %arg2[%c0_11, %c0_12, %c0_13], %34 {strides = array<i32>} : memref<1x8x128xf32, #tpu.memory_space<vmem>>, vector<1x8x128xf32>,
    return
  }
  func.func @transform_0(%arg0: i32) -> (i32, i32, i32) {
    %c0_i32 = arith.constant 0 : i32
    %c0_i32_0 = arith.constant 0 : i32
    %c0_i32_1 = arith.constant 0 : i32
    return %c0_i32, %arg0, %c0_i32_0 : i32, i32, i32
  }
  func.func @transform_1(%arg0: i32) -> (i32, i32, i32) {
    %c0_i32 = arith.constant 0 : i32
    %c0_i32_0 = arith.constant 0 : i32
    %c0_i32_1 = arith.constant 0 : i32
    return %arg0, %c0_i32, %c0_i32_0 : i32, i32, i32
  }
}

</mosaic_0001>

<llo_original>
// kernel: tpu_custom_call.1
$region0: #{tpu_custom_call.1}
  #allocation0 [shape = 'u32[]', space=smem, size = 0x4, offset = 0x4, fixed_abs, tag = 'smem constant byte address 0x4 - core index']
  #allocation1 [shape = 'u32[144,128]{1,0:T(1,128)}', space=vmem, size = 0x12000, scoped, tag = 'internal scratch']
  #allocation6 [shape = 's32[]', space=sflag, size = 0x4, offset = 0, fixed_abs, tag = 'sflag constant byte address 0x0 - dummy sync flag']
  %s0 = inlined_call_operand.hbm [shape: f32[3,2,128], index: 0, kind: input, shape index: {}]
  %s1 = inlined_call_operand.hbm [shape: f32[1,8,128], index: 1, kind: output, shape index: {}]
  %s2 = sld [smem:[#allocation0]]
  $region18: #{tpu_custom_call.1} parent=0
    _
  %s4 = ssub.s32 1, %s2
  %s5 = scalar_select 0, %s4, %s2
  $region1: #{tpu_custom_call.1} parent=0
    #allocation2 [shape = 'u8[12288]{0}', space=vmem, size = 0x3000, scoped, tag = 'input window, operand 0, single buffered']
    #allocation3 [shape = 's32[1]{0}', space=sflag, size = 0x4, scoped, tag = 'scoped memory for tpu_custom_call.1']
    #allocation4 [shape = 's32[1]{0}', space=sflag, size = 0x4, scoped, tag = 'scoped memory for tpu_custom_call.1']
    #allocation5 [shape = 'u8[4096]{0}', space=vmem, size = 0x1000, scoped, tag = 'output window, operand 0, single buffered']
    %6 = vsyncpa [#allocation3], 0
    %7 = vsyncpa [#allocation4], 0
    // Predicated region
    $region2: #{tpu_custom_call.1} parent=1 // pred_check
      _
    $region3: #{tpu_custom_call.1} parent=1 // pred_check_branch
      %9 = sbr.rel (0) target = $region5
    $region4: #{tpu_custom_call.1} parent=1 // pred_region
      #allocation7 [shape = 'u32[6]{0}', space=smem, size = 0x18, scoped, tag = 'DMA stride descriptor']
      %s11 = ssub.s32 384, 96
      %12 = vsyncadd [#allocation3], %s11
      %s14 = sshll.u32 1, 14
      %s15 = sxor.u32 4294967295, %s14
      %s17 = sld [smem:[#allocation0]]
      %s18 = sadd.s32 2, %s17
      %s20 = sshll.u32 7, 26
      %s21 = sxor.u32 4294967295, %s20
      %s22 = sand.u32 0, %s21
      %s23 = sshll.u32 %s18, 26
      %s24 = sor.u32 %s22, %s23
      %s25 = sshll.u32 [#allocation2], 4
      %s26 = int_to_ptr.vmem [resolvable:$true] %s25
      %32 = sst [smem:[#allocation7]] 32
      %s33 = scalar_lea.smem [#allocation7], 1
      %34 = sst [smem:[%s33]] 128
      %s35 = scalar_lea.smem [#allocation7], 2
      %36 = sst [smem:[%s35]] 1
      %s37 = scalar_lea.smem [#allocation7], 3
      %38 = sst [smem:[%s37]] 32
      %s39 = scalar_lea.smem [#allocation7], 4
      %40 = sst [smem:[%s39]] 32
      %s41 = scalar_lea.smem [#allocation7], 5
      %42 = sst [smem:[%s41]] 2
      %44 = dma.general %s0, 96, %s26, [#allocation3], [#allocation6], [#allocation7], %s24, 0
    $region5: #{tpu_custom_call.1} parent=1 // pred_fallthru
      _
    // Predicated region
    $region6: #{tpu_custom_call.1} parent=1 // pred_check
      _
    $region7: #{tpu_custom_call.1} parent=1 // pred_check_branch
      %46 = sbr.rel (0) target = $region9
    $region8: #{tpu_custom_call.1} parent=1 // pred_region
      %47 = dma.done [#allocation3], 384
    $region9: #{tpu_custom_call.1} parent=1 // pred_fallthru
      _
    %v48 = vld [vmem:[#allocation2] sm:$0xff]
    %s49 = scalar_lea.vmem [#allocation2], 8
    %v50 = vld [vmem:[%s49] sm:$0xff]
    %v51 = vsub.f32 %v50, %v48
    %v52 = vadd.f32 %v51, 0.0
    %v53 = vmul.f32 %v51, %v51
    %v54 = vadd.f32 %v53, 0.0
    %s55 = scalar_lea.vmem [#allocation2], 16
    %v56 = vld [vmem:[%s55] sm:$0xff]
    %v57 = vsub.f32 %v56, %v48
    %v58 = vadd.f32 %v52, %v57
    %v59 = vmul.f32 %v57, %v57
    %v60 = vadd.f32 %v54, %v59
    %v61 = vmul.f32 %v58, %v58
    %v62 = vmul.f32 %v61, 0.33333334
    %v63 = vsub.f32 %v60, %v62
    %v64 = vmul.f32 %v63, 0.5
    %v65 = vlaneseq
    %v66 = vshrl.u32 %v65, 7
    %s67 = smul.u32 0, 8
    %v68 = vstv %s67
    %v69 = vadd.s32 %v66, %v68
    %vm70 = vcmp.lt.s32.totalorder %v69, 2
    %v71 = vsel %vm70, %v64, 0.0
    %v72 = vadd.f32 %v71, 0.0
    %73 = vst [vmem:[#allocation5] sm:$0xff] %v72
    // Predicated region
    $region10: #{tpu_custom_call.1} parent=1 // pred_check
      _
    $region11: #{tpu_custom_call.1} parent=1 // pred_check_branch
      %75 = sbr.rel (0) target = $region13
    $region12: #{tpu_custom_call.1} parent=1 // pred_region
      %s77 = ssub.s32 128, 128
      %78 = vsyncadd [#allocation4], %s77
      %s80 = sshll.u32 [#allocation5], 4
      %s81 = int_to_ptr.vmem [resolvable:$true] %s80
      %83 = dma.vmem_to_hbm [thread:$0]  %s81, 128, %s1, [#allocation4]
    $region13: #{tpu_custom_call.1} parent=1 // pred_fallthru
      _
    // Predicated region
    $region14: #{tpu_custom_call.1} parent=1 // pred_check
      _
    $region15: #{tpu_custom_call.1} parent=1 // pred_check_branch
      %85 = sbr.rel (0) target = $region17
    $region16: #{tpu_custom_call.1} parent=1 // pred_region
      %86 = dma.done [#allocation4], 128
    $region17: #{tpu_custom_call.1} parent=1 // pred_fallthru
      _
    %87 = vsyncpa [#allocation3], 1
    %88 = vsyncpa [#allocation4], 1

</llo_original>
